<compile_context>
chip_gen: v5e
topology: v5e:2x2
jax: 0.10.0
libtpu: 0.0.40
codegen_flags: <defaults>
</compile_context>

<pallas_src>
import jax
import jax.numpy as jnp
from jax.experimental import pallas as pl
from jax.experimental.pallas import tpu as pltpu


def se_gate_kernel(s_ref, w_ref, b_ref, x_ref, o_ref):
    # s_ref: (1, Cin)     squeeze vector
    # w_ref: (Cout, Cin)  1x1-conv weight (PyTorch layout, no transpose)
    # b_ref: (Cout, 1)    bias
    # x_ref: (Cout, HW)   feature map (channels x spatial), NCHW view for N=1
    # o_ref: (Cout, HW)
    # Gate math in f32 regardless of input dtype.
    s = jnp.maximum(s_ref[...].astype(jnp.float32), 0.0)               # ReLU
    w = w_ref[...].astype(jnp.float32)
    b = b_ref[...].astype(jnp.float32)
    # 1x1 conv as VPU multiply + XLU lane-reduce: a (1x32)@(32x120) matvec is
    # pure latency on the MXU, so keep it off that unit.
    y = jnp.sum(w * s, axis=1, keepdims=True) + b                       # (Cout, 1)
    g = jnp.clip(y * (1.0 / 6.0) + 0.5, 0.0, 1.0)                       # Hardsigmoid
    o_ref[...] = (x_ref[...] * g).astype(o_ref.dtype)                   # broadcast over lanes


def se_gate(x83, x81, weight, bias):
    """x83: (1, Cin, 1, 1), x81: (1, Cout, H, W),
    weight: (Cout, Cin, 1, 1), bias: (Cout,)"""
    n, cin, _, _ = x83.shape
    _, cout, h, w = x81.shape
    hw = h * w
    assert n == 1  # TODO(synk): batch>1 would need a batched gate layout

    # Free (contiguous) reshapes only -- no transposes, no extra HBM traffic.
    s = x83.reshape(1, cin)                 # (1, Cin)
    wmat = weight.reshape(cout, cin)        # (Cout, Cin)
    b = bias.reshape(cout, 1)               # (Cout, 1)
    x = x81.reshape(cout, hw)               # (Cout, HW)  -- NCHW view, N=1

    # Advisory cost estimate using real itemsizes / real traffic.
    bytes_accessed = (
        s.size * s.dtype.itemsize
        + wmat.size * wmat.dtype.itemsize
        + b.size * b.dtype.itemsize
        + x.size * x.dtype.itemsize            # feature map in
        + x.size * x81.dtype.itemsize          # feature map out
    )
    cost = pl.CostEstimate(
        flops=2 * cin * cout + 5 * cout + hw * cout,
        transcendentals=0,
        bytes_accessed=bytes_accessed,
    )

    # Single full-array block: no grid, everything lands in VMEM once.
    out = pl.pallas_call(
        se_gate_kernel,
        out_shape=jax.ShapeDtypeStruct((cout, hw), x81.dtype),
        cost_estimate=cost,
    )(s, wmat, b, x)

    # (Cout, HW) -> (1, Cout, H, W) is a free reshape back to NCHW.
    return out.reshape(1, cout, h, w)


if __name__ == "__main__":
    key = jax.random.PRNGKey(0)
    k1, k2, k3, k4 = jax.random.split(key, 4)

    # Shapes from the original module spec.
    CIN, COUT, H, W = 32, 120, 14, 14

    x83 = jax.random.normal(k1, (1, CIN, 1, 1), dtype=jnp.float32)
    x81 = jax.random.normal(k2, (1, COUT, H, W), dtype=jnp.float32)
    weight = jax.random.normal(k3, (COUT, CIN, 1, 1), dtype=jnp.float32) * 0.1
    bias = jax.random.normal(k4, (COUT,), dtype=jnp.float32) * 0.1

    out = se_gate(x83, x81, weight, bias)
    jax.block_until_ready(out)

    # pure-JAX reference (matches the PyTorch module semantics)
    s_ref = jnp.maximum(x83.reshape(1, CIN), 0.0)
    y_ref = s_ref @ weight.reshape(COUT, CIN).T + bias
    g_ref = jnp.clip(y_ref / 6.0 + 0.5, 0.0, 1.0).reshape(1, COUT, 1, 1)
    expected = g_ref * x81

    assert out.shape == (1, COUT, H, W)
    assert jnp.allclose(out, expected, atol=1e-5, rtol=1e-5)

    print("KERNEL_OK")
</pallas_src>

<mosaic_0001>
module attributes {stable_mosaic.version = 11 : i64} {
  func.func @se_gate_kernel(%arg0: memref<1x32xf32, #tpu.memory_space<vmem>>, %arg1: memref<120x32xf32, #tpu.memory_space<vmem>>, %arg2: memref<120x1xf32, #tpu.memory_space<vmem>>, %arg3: memref<120x196xf32, #tpu.memory_space<vmem>>, %arg4: memref<120x196xf32, #tpu.memory_space<vmem>>) attributes {dimension_semantics = [], scalar_prefetch = 0 : i64, scratch_operands = 0 : i64, tpu.core_type = #tpu.core_type<tc>} {
    %c0 = arith.constant 0 : index
    %c0_0 = arith.constant 0 : index
    %0 = vector.load %arg0[%c0, %c0_0] : memref<1x32xf32, #tpu.memory_space<vmem>>, vector<1x32xf32>
    %cst = arith.constant 0.000000e+00 : f32
    %1 = vector.broadcast %cst : f32 to vector<1x32xf32>
    %2 = arith.maximumf %0, %1 : vector<1x32xf32>
    %c0_1 = arith.constant 0 : index
    %c0_2 = arith.constant 0 : index
    %3 = vector.load %arg1[%c0_1, %c0_2] : memref<120x32xf32, #tpu.memory_space<vmem>>, vector<120x32xf32>
    %c0_3 = arith.constant 0 : index
    %c0_4 = arith.constant 0 : index
    %4 = vector.load %arg2[%c0_3, %c0_4] : memref<120x1xf32, #tpu.memory_space<vmem>>, vector<120x1xf32>
    %5 = vector.broadcast %2 : vector<1x32xf32> to vector<120x32xf32>
    %6 = arith.mulf %3, %5 : vector<120x32xf32>
    %cst_5 = arith.constant dense<0.000000e+00> : vector<120xf32>
    %7 = vector.multi_reduction <add>, %6, %cst_5 [1] : vector<120x32xf32> to vector<120xf32>
    %8 = vector.shape_cast %7 : vector<120xf32> to vector<120x1xf32>
    %9 = arith.addf %8, %4 : vector<120x1xf32>
    %cst_6 = arith.constant 0.166666672 : f32
    %10 = vector.broadcast %cst_6 : f32 to vector<120x1xf32>
    %11 = arith.mulf %9, %10 : vector<120x1xf32>
    %cst_7 = arith.constant 5.000000e-01 : f32
    %12 = vector.broadcast %cst_7 : f32 to vector<120x1xf32>
    %13 = arith.addf %11, %12 : vector<120x1xf32>
    %cst_8 = arith.constant 0.000000e+00 : f32
    %cst_9 = arith.constant 1.000000e+00 : f32
    %14 = vector.broadcast %cst_8 : f32 to vector<120x1xf32>
    %15 = arith.maximumf %14, %13 : vector<120x1xf32>
    %16 = vector.broadcast %cst_9 : f32 to vector<120x1xf32>
    %17 = arith.minimumf %16, %15 : vector<120x1xf32>
    %c0_10 = arith.constant 0 : index
    %c0_11 = arith.constant 0 : index
    %18 = vector.load %arg3[%c0_10, %c0_11] : memref<120x196xf32, #tpu.memory_space<vmem>>, vector<120x196xf32>
    %19 = vector.broadcast %17 : vector<120x1xf32> to vector<120x196xf32>
    %20 = arith.mulf %18, %19 : vector<120x196xf32>
    %c0_12 = arith.constant 0 : index
    %c0_13 = arith.constant 0 : index
    %21 = vector.load %arg4[%c0_12, %c0_13] : memref<120x196xf32, #tpu.memory_space<vmem>>, vector<120x196xf32>
    tpu.vector_store %arg4[%c0_12, %c0_13], %20 {strides = array<i32>} : memref<120x196xf32, #tpu.memory_space<vmem>>, vector<120x196xf32>,
    return
  }
}

</mosaic_0001>

<llo_original>
// kernel: tpu_custom_call.1
$region0: #{tpu_custom_call.1}
  #allocation0 [shape = 'u32[]', space=smem, size = 0x4, offset = 0x4, fixed_abs, tag = 'smem constant byte address 0x4 - core index']
  #allocation1 [shape = 'u32[72,128]{1,0:T(1,128)}', space=vmem, size = 0x9000, scoped, tag = 'internal scratch']
  %s0 = inlined_call_operand.vmem [shape: f32[1,32], index: 0, kind: input, shape index: {}]
  %s1 = inlined_call_operand.vmem [shape: f32[120,32], index: 1, kind: input, shape index: {}]
  %s2 = inlined_call_operand.vmem [shape: f32[120,1], index: 2, kind: input, shape index: {}]
  %s3 = inlined_call_operand.vmem [shape: f32[120,196], index: 3, kind: input, shape index: {}]
  %s4 = inlined_call_operand.vmem [shape: f32[120,196], index: 4, kind: output, shape index: {}]
  %s5 = sld [smem:[#allocation0]]
  $region26: #{tpu_custom_call.1} parent=0
    _
  %s7 = ssub.s32 1, %s5
  %s8 = scalar_select 0, %s7, %s5
  // Predicated region
  $region2: #{tpu_custom_call.1} parent=0 // pred_check
    _
  $region3: #{tpu_custom_call.1} parent=0 // pred_check_branch
    %10 = sbr.rel (0) target = $region5
  $region4: #{tpu_custom_call.1} parent=0 // pred_region
    _
  $region5: #{tpu_custom_call.1} parent=0 // pred_fallthru
    _
  // Predicated region
  $region6: #{tpu_custom_call.1} parent=0 // pred_check
    _
  $region7: #{tpu_custom_call.1} parent=0 // pred_check_branch
    %12 = sbr.rel (0) target = $region9
  $region8: #{tpu_custom_call.1} parent=0 // pred_region
    _
  $region9: #{tpu_custom_call.1} parent=0 // pred_fallthru
    _
  // Predicated region
  $region10: #{tpu_custom_call.1} parent=0 // pred_check
    _
  $region11: #{tpu_custom_call.1} parent=0 // pred_check_branch
    %14 = sbr.rel (0) target = $region13
  $region12: #{tpu_custom_call.1} parent=0 // pred_region
    _
  $region13: #{tpu_custom_call.1} parent=0 // pred_fallthru
    _
  // Predicated region
  $region14: #{tpu_custom_call.1} parent=0 // pred_check
    _
  $region15: #{tpu_custom_call.1} parent=0 // pred_check_branch
    %16 = sbr.rel (0) target = $region17
  $region16: #{tpu_custom_call.1} parent=0 // pred_region
    _
  $region17: #{tpu_custom_call.1} parent=0 // pred_fallthru
    _
  %v17 = vld [vmem:[%s0] sm:$0x1]
  %v18 = vmax.f32 %v17, 0.0
  %v19 = vld [vmem:[%s1] sm:$0xff]
  %v20 = vld [vmem:[%s1 + $0x8] sm:$0xff]
  %v21 = vld [vmem:[%s1 + $0x10] sm:$0xff]
  %v22 = vld [vmem:[%s1 + $0x18] sm:$0xff]
  %v23 = vld [vmem:[%s1 + $0x20] sm:$0xff]
  %v24 = vld [vmem:[%s1 + $0x28] sm:$0xff]
  %v25 = vld [vmem:[%s1 + $0x30] sm:$0xff]
  %v26 = vld [vmem:[%s1 + $0x38] sm:$0xff]
  %v27 = vld [vmem:[%s1 + $0x40] sm:$0xff]
  %v28 = vld [vmem:[%s1 + $0x48] sm:$0xff]
  %v29 = vld [vmem:[%s1 + $0x50] sm:$0xff]
  %v30 = vld [vmem:[%s1 + $0x58] sm:$0xff]
  %v31 = vld [vmem:[%s1 + $0x60] sm:$0xff]
  %v32 = vld [vmem:[%s1 + $0x68] sm:$0xff]
  %v33 = vld [vmem:[%s1 + $0x70] sm:$0xff]
  %v34 = vld [vmem:[%s2] sm:$0xff]
  %v35 = vld [vmem:[%s2 + $0x8] sm:$0xff]
  %v36 = vld [vmem:[%s2 + $0x10] sm:$0xff]
  %v37 = vld [vmem:[%s2 + $0x18] sm:$0xff]
  %v38 = vld [vmem:[%s2 + $0x20] sm:$0xff]
  %v39 = vld [vmem:[%s2 + $0x28] sm:$0xff]
  %v40 = vld [vmem:[%s2 + $0x30] sm:$0xff]
  %v41 = vld [vmem:[%s2 + $0x38] sm:$0xff]
  %v42 = vld [vmem:[%s2 + $0x40] sm:$0xff]
  %v43 = vld [vmem:[%s2 + $0x48] sm:$0xff]
  %v44 = vld [vmem:[%s2 + $0x50] sm:$0xff]
  %v45 = vld [vmem:[%s2 + $0x58] sm:$0xff]
  %v46 = vld [vmem:[%s2 + $0x60] sm:$0xff]
  %v47 = vld [vmem:[%s2 + $0x68] sm:$0xff]
  %v48 = vld [vmem:[%s2 + $0x70] sm:$0xff]
  %v50 = vperm.slane %v18, 0
  %v52 = vmul.f32 %v19, %v50
  %v53 = vmul.f32 %v20, %v50
  %v54 = vmul.f32 %v21, %v50
  %v55 = vmul.f32 %v22, %v50
  %v56 = vmul.f32 %v23, %v50
  %v57 = vmul.f32 %v24, %v50
  %v58 = vmul.f32 %v25, %v50
  %v59 = vmul.f32 %v26, %v50
  %v60 = vmul.f32 %v27, %v50
  %v61 = vmul.f32 %v28, %v50
  %v62 = vmul.f32 %v29, %v50
  %v63 = vmul.f32 %v30, %v50
  %v64 = vmul.f32 %v31, %v50
  %v65 = vmul.f32 %v32, %v50
  %v66 = vmul.f32 %v33, %v50
  %vm67 = vcmask 261120
  %v68 = vsel %vm67, %v52, 0.0
  %69 = vadd.xlane.f32.xlu0 %v68
  %v70 = vpop.xlane.xlu0 %69
  %v71 = vsel %vm67, %v53, 0.0
  %72 = vadd.xlane.f32.xlu0 %v71
  %v73 = vpop.xlane.xlu0 %72
  %v74 = vsel %vm67, %v54, 0.0
  %75 = vadd.xlane.f32.xlu0 %v74
  %v76 = vpop.xlane.xlu0 %75
  %v77 = vsel %vm67, %v55, 0.0
  %78 = vadd.xlane.f32.xlu0 %v77
  %v79 = vpop.xlane.xlu0 %78
  %v80 = vsel %vm67, %v56, 0.0
  %81 = vadd.xlane.f32.xlu0 %v80
  %v82 = vpop.xlane.xlu0 %81
  %v83 = vsel %vm67, %v57, 0.0
  %84 = vadd.xlane.f32.xlu0 %v83
  %v85 = vpop.xlane.xlu0 %84
  %v86 = vsel %vm67, %v58, 0.0
  %87 = vadd.xlane.f32.xlu0 %v86
  %v88 = vpop.xlane.xlu0 %87
  %v89 = vsel %vm67, %v59, 0.0
  %90 = vadd.xlane.f32.xlu0 %v89
  %v91 = vpop.xlane.xlu0 %90
  %v92 = vsel %vm67, %v60, 0.0
  %93 = vadd.xlane.f32.xlu0 %v92
  %v94 = vpop.xlane.xlu0 %93
  %v95 = vsel %vm67, %v61, 0.0
  %96 = vadd.xlane.f32.xlu0 %v95
  %v97 = vpop.xlane.xlu0 %96
  %v98 = vsel %vm67, %v62, 0.0
  %99 = vadd.xlane.f32.xlu0 %v98
  %v100 = vpop.xlane.xlu0 %99
  %v101 = vsel %vm67, %v63, 0.0
  %102 = vadd.xlane.f32.xlu0 %v101
  %v103 = vpop.xlane.xlu0 %102
  %v104 = vsel %vm67, %v64, 0.0
  %105 = vadd.xlane.f32.xlu0 %v104
  %v106 = vpop.xlane.xlu0 %105
  %v107 = vsel %vm67, %v65, 0.0
  %108 = vadd.xlane.f32.xlu0 %v107
  %v109 = vpop.xlane.xlu0 %108
  %v110 = vsel %vm67, %v66, 0.0
  %111 = vadd.xlane.f32.xlu0 %v110
  %v112 = vpop.xlane.xlu0 %111
  %v113 = vadd.f32 %v70, %v34
  %v114 = vadd.f32 %v73, %v35
  %v115 = vadd.f32 %v76, %v36
  %v116 = vadd.f32 %v79, %v37
  %v117 = vadd.f32 %v82, %v38
  %v118 = vadd.f32 %v85, %v39
  %v119 = vadd.f32 %v88, %v40
  %v120 = vadd.f32 %v91, %v41
  %v121 = vadd.f32 %v94, %v42
  %v122 = vadd.f32 %v97, %v43
  %v123 = vadd.f32 %v100, %v44
  %v124 = vadd.f32 %v103, %v45
  %v125 = vadd.f32 %v106, %v46
  %v126 = vadd.f32 %v109, %v47
  %v127 = vadd.f32 %v112, %v48
  %v128 = vmul.f32 %v113, 0.16666667
  %v129 = vmul.f32 %v114, 0.16666667
  %v130 = vmul.f32 %v115, 0.16666667
  %v131 = vmul.f32 %v116, 0.16666667
  %v132 = vmul.f32 %v117, 0.16666667
  %v133 = vmul.f32 %v118, 0.16666667
  %v134 = vmul.f32 %v119, 0.16666667
  %v135 = vmul.f32 %v120, 0.16666667
  %v136 = vmul.f32 %v121, 0.16666667
  %v137 = vmul.f32 %v122, 0.16666667
  %v138 = vmul.f32 %v123, 0.16666667
  %v139 = vmul.f32 %v124, 0.16666667
  %v140 = vmul.f32 %v125, 0.16666667
  %v141 = vmul.f32 %v126, 0.16666667
  %v142 = vmul.f32 %v127, 0.16666667
  %v143 = vadd.f32 %v128, 0.5
  %v144 = vadd.f32 %v129, 0.5
  %v145 = vadd.f32 %v130, 0.5
  %v146 = vadd.f32 %v131, 0.5
  %v147 = vadd.f32 %v132, 0.5
  %v148 = vadd.f32 %v133, 0.5
  %v149 = vadd.f32 %v134, 0.5
  %v150 = vadd.f32 %v135, 0.5
  %v151 = vadd.f32 %v136, 0.5
  %v152 = vadd.f32 %v137, 0.5
  %v153 = vadd.f32 %v138, 0.5
  %v154 = vadd.f32 %v139, 0.5
  %v155 = vadd.f32 %v140, 0.5
  %v156 = vadd.f32 %v141, 0.5
  %v157 = vadd.f32 %v142, 0.5
  %v158 = vmax.f32 %v143, 0.0
  %v159 = vmax.f32 %v144, 0.0
  %v160 = vmax.f32 %v145, 0.0
  %v161 = vmax.f32 %v146, 0.0
  %v162 = vmax.f32 %v147, 0.0
  %v163 = vmax.f32 %v148, 0.0
  %v164 = vmax.f32 %v149, 0.0
  %v165 = vmax.f32 %v150, 0.0
  %v166 = vmax.f32 %v151, 0.0
  %v167 = vmax.f32 %v152, 0.0
  %v168 = vmax.f32 %v153, 0.0
  %v169 = vmax.f32 %v154, 0.0
  %v170 = vmax.f32 %v155, 0.0
  %v171 = vmax.f32 %v156, 0.0
  %v172 = vmax.f32 %v157, 0.0
  %v173 = vmin.f32 %v158, 1.0
  %v174 = vmin.f32 %v159, 1.0
  %v175 = vmin.f32 %v160, 1.0
  %v176 = vmin.f32 %v161, 1.0
  %v177 = vmin.f32 %v162, 1.0
  %v178 = vmin.f32 %v163, 1.0
  %v179 = vmin.f32 %v164, 1.0
  %v180 = vmin.f32 %v165, 1.0
  %v181 = vmin.f32 %v166, 1.0
  %v182 = vmin.f32 %v167, 1.0
  %v183 = vmin.f32 %v168, 1.0
  %v184 = vmin.f32 %v169, 1.0
  %v185 = vmin.f32 %v170, 1.0
  %v186 = vmin.f32 %v171, 1.0
  %v187 = vmin.f32 %v172, 1.0
  %v188 = vld [vmem:[%s3] sm:$0xff]
  %v189 = vld [vmem:[%s3 + $0x8] sm:$0xff]
  %v190 = vld [vmem:[%s3 + $0x10] sm:$0xff]
  %v191 = vld [vmem:[%s3 + $0x18] sm:$0xff]
  %v192 = vld [vmem:[%s3 + $0x20] sm:$0xff]
  %v193 = vld [vmem:[%s3 + $0x28] sm:$0xff]
  %v194 = vld [vmem:[%s3 + $0x30] sm:$0xff]
  %v195 = vld [vmem:[%s3 + $0x38] sm:$0xff]
  %v196 = vld [vmem:[%s3 + $0x40] sm:$0xff]
  %v197 = vld [vmem:[%s3 + $0x48] sm:$0xff]
  %v198 = vld [vmem:[%s3 + $0x50] sm:$0xff]
  %v199 = vld [vmem:[%s3 + $0x58] sm:$0xff]
  %v200 = vld [vmem:[%s3 + $0x60] sm:$0xff]
  %v201 = vld [vmem:[%s3 + $0x68] sm:$0xff]
  %v202 = vld [vmem:[%s3 + $0x70] sm:$0xff]
  %v203 = vld [vmem:[%s3 + $0x78] sm:$0xff]
  %v204 = vld [vmem:[%s3 + $0x80] sm:$0xff]
  %v205 = vld [vmem:[%s3 + $0x88] sm:$0xff]
  %v206 = vld [vmem:[%s3 + $0x90] sm:$0xff]
  %v207 = vld [vmem:[%s3 + $0x98] sm:$0xff]
  %v208 = vld [vmem:[%s3 + $0xa0] sm:$0xff]
  %v209 = vld [vmem:[%s3 + $0xa8] sm:$0xff]
  %v210 = vld [vmem:[%s3 + $0xb0] sm:$0xff]
  %v211 = vld [vmem:[%s3 + $0xb8] sm:$0xff]
  %v212 = vld [vmem:[%s3 + $0xc0] sm:$0xff]
  %v213 = vld [vmem:[%s3 + $0xc8] sm:$0xff]
  %v214 = vld [vmem:[%s3 + $0xd0] sm:$0xff]
  %v215 = vld [vmem:[%s3 + $0xd8] sm:$0xff]
  %v216 = vld [vmem:[%s3 + $0xe0] sm:$0xff]
  %v217 = vld [vmem:[%s3 + $0xe8] sm:$0xff]
  %219 = vset.pattern.permute.xlu0 0
  %220 = vperm.xlu0 %219, %v173
  %v221 = vpop.permute.xlu0 %220
  %224 = vset.pattern.permute.xlu0 0
  %225 = vperm.xlu0 %224, %v174
  %v226 = vpop.permute.xlu0 %225
  %229 = vset.pattern.permute.xlu0 0
  %230 = vperm.xlu0 %229, %v175
  %v231 = vpop.permute.xlu0 %230
  %234 = vset.pattern.permute.xlu0 0
  %235 = vperm.xlu0 %234, %v176
  %v236 = vpop.permute.xlu0 %235
  %239 = vset.pattern.permute.xlu0 0
  %240 = vperm.xlu0 %239, %v177
  %v241 = vpop.permute.xlu0 %240
  %244 = vset.pattern.permute.xlu0 0
  %245 = vperm.xlu0 %244, %v178
  %v246 = vpop.permute.xlu0 %245
  %249 = vset.pattern.permute.xlu0 0
  %250 = vperm.xlu0 %249, %v179
  %v251 = vpop.permute.xlu0 %250
  %254 = vset.pattern.permute.xlu0 0
  %255 = vperm.xlu0 %254, %v180
  %v256 = vpop.permute.xlu0 %255
  %259 = vset.pattern.permute.xlu0 0
  %260 = vperm.xlu0 %259, %v181
  %v261 = vpop.permute.xlu0 %260
  %264 = vset.pattern.permute.xlu0 0
  %265 = vperm.xlu0 %264, %v182
  %v266 = vpop.permute.xlu0 %265
  %269 = vset.pattern.permute.xlu0 0
  %270 = vperm.xlu0 %269, %v183
  %v271 = vpop.permute.xlu0 %270
  %274 = vset.pattern.permute.xlu0 0
  %275 = vperm.xlu0 %274, %v184
  %v276 = vpop.permute.xlu0 %275
  %279 = vset.pattern.permute.xlu0 0
  %280 = vperm.xlu0 %279, %v185
  %v281 = vpop.permute.xlu0 %280
  %284 = vset.pattern.permute.xlu0 0
  %285 = vperm.xlu0 %284, %v186
  %v286 = vpop.permute.xlu0 %285
  %289 = vset.pattern.permute.xlu0 0
  %290 = vperm.xlu0 %289, %v187
  %v291 = vpop.permute.xlu0 %290
  %v293 = vmul.f32 %v188, %v221
  %v294 = vmul.f32 %v189, %v221
  %v295 = vmul.f32 %v190, %v226
  %v296 = vmul.f32 %v191, %v226
  %v297 = vmul.f32 %v192, %v231
  %v298 = vmul.f32 %v193, %v231
  %v299 = vmul.f32 %v194, %v236
  %v300 = vmul.f32 %v195, %v236
  %v301 = vmul.f32 %v196, %v241
  %v302 = vmul.f32 %v197, %v241
  %v303 = vmul.f32 %v198, %v246
  %v304 = vmul.f32 %v199, %v246
  %v305 = vmul.f32 %v200, %v251
  %v306 = vmul.f32 %v201, %v251
  %v307 = vmul.f32 %v202, %v256
  %v308 = vmul.f32 %v203, %v256
  %v309 = vmul.f32 %v204, %v261
  %v310 = vmul.f32 %v205, %v261
  %v311 = vmul.f32 %v206, %v266
  %v312 = vmul.f32 %v207, %v266
  %v313 = vmul.f32 %v208, %v271
  %v314 = vmul.f32 %v209, %v271
  %v315 = vmul.f32 %v210, %v276
  %v316 = vmul.f32 %v211, %v276
  %v317 = vmul.f32 %v212, %v281
  %v318 = vmul.f32 %v213, %v281
  %v319 = vmul.f32 %v214, %v286
  %v320 = vmul.f32 %v215, %v286
  %v321 = vmul.f32 %v216, %v291
  %v322 = vmul.f32 %v217, %v291
  %323 = vst [vmem:[%s4] sm:$0xff] %v293
  %vm324 = vcmask 556032
  %325 = vst.msk [vmem:[%s4 + $0x8] sm:$0xff] %vm324, %v294
  %326 = vst [vmem:[%s4 + $0x10] sm:$0xff] %v295
  %327 = vst.msk [vmem:[%s4 + $0x18] sm:$0xff] %vm324, %v296
  %328 = vst [vmem:[%s4 + $0x20] sm:$0xff] %v297
  %329 = vst.msk [vmem:[%s4 + $0x28] sm:$0xff] %vm324, %v298
  %330 = vst [vmem:[%s4 + $0x30] sm:$0xff] %v299
  %331 = vst.msk [vmem:[%s4 + $0x38] sm:$0xff] %vm324, %v300
  %332 = vst [vmem:[%s4 + $0x40] sm:$0xff] %v301
  %333 = vst.msk [vmem:[%s4 + $0x48] sm:$0xff] %vm324, %v302
  %334 = vst [vmem:[%s4 + $0x50] sm:$0xff] %v303
  %335 = vst.msk [vmem:[%s4 + $0x58] sm:$0xff] %vm324, %v304
  %336 = vst [vmem:[%s4 + $0x60] sm:$0xff] %v305
  %337 = vst.msk [vmem:[%s4 + $0x68] sm:$0xff] %vm324, %v306
  %338 = vst [vmem:[%s4 + $0x70] sm:$0xff] %v307
  %339 = vst.msk [vmem:[%s4 + $0x78] sm:$0xff] %vm324, %v308
  %340 = vst [vmem:[%s4 + $0x80] sm:$0xff] %v309
  %341 = vst.msk [vmem:[%s4 + $0x88] sm:$0xff] %vm324, %v310
  %342 = vst [vmem:[%s4 + $0x90] sm:$0xff] %v311
  %343 = vst.msk [vmem:[%s4 + $0x98] sm:$0xff] %vm324, %v312
  %344 = vst [vmem:[%s4 + $0xa0] sm:$0xff] %v313
  %345 = vst.msk [vmem:[%s4 + $0xa8] sm:$0xff] %vm324, %v314
  %346 = vst [vmem:[%s4 + $0xb0] sm:$0xff] %v315
  %347 = vst.msk [vmem:[%s4 + $0xb8] sm:$0xff] %vm324, %v316
  %348 = vst [vmem:[%s4 + $0xc0] sm:$0xff] %v317
  %349 = vst.msk [vmem:[%s4 + $0xc8] sm:$0xff] %vm324, %v318
  %350 = vst [vmem:[%s4 + $0xd0] sm:$0xff] %v319
  %351 = vst.msk [vmem:[%s4 + $0xd8] sm:$0xff] %vm324, %v320
  %352 = vst [vmem:[%s4 + $0xe0] sm:$0xff] %v321
  %353 = vst.msk [vmem:[%s4 + $0xe8] sm:$0xff] %vm324, %v322
  // Predicated region
  $region18: #{tpu_custom_call.1} parent=0 // pred_check
    _
  $region19: #{tpu_custom_call.1} parent=0 // pred_check_branch
    %355 = sbr.rel (0) target = $region21
  $region20: #{tpu_custom_call.1} parent=0 // pred_region
    _
  $region21: #{tpu_custom_call.1} parent=0 // pred_fallthru
    _
  // Predicated region
  $region22: #{tpu_custom_call.1} parent=0 // pred_check
    _
  $region23: #{tpu_custom_call.1} parent=0 // pred_check_branch
    %357 = sbr.rel (0) target = $region25
  $region24: #{tpu_custom_call.1} parent=0 // pred_region
    _
  $region25: #{tpu_custom_call.1} parent=0 // pred_fallthru
    _

</llo_original>
